<compile_context>
chip_gen: v7x
topology: tpu7x:2x2x1
jax: 0.10.0
libtpu: 0.0.40
codegen_flags: <defaults>
</compile_context>

<pallas_src>
import math

import jax
import jax.numpy as jnp
from jax.experimental import pallas as pl
from jax.experimental.pallas import tpu as pltpu

_MAX_PARALLEL_DMAS = 4
_MIN_BYTES_PER_DMA = 1 << 20  # below ~1 MiB/chunk, a single DMA is already optimal


def _pick_num_chunks(shape, itemsize):
    """Static (trace-time) choice of how many concurrent leading-dim DMAs to issue."""
    if len(shape) == 0:
        return 1
    lead = shape[0]
    nbytes = math.prod(shape) * itemsize
    for c in range(min(_MAX_PARALLEL_DMAS, lead), 1, -1):
        if lead % c == 0 and nbytes // c >= _MIN_BYTES_PER_DMA:
            return c
    return 1


def _make_identity_dma_kernel(n_chunks, chunk_rows):
    """HBM->HBM identity copy: no VMEM staging, pure DMA-engine traffic."""

    def kernel(x_hbm, o_hbm, sems):
        if n_chunks == 1:
            copies = [pltpu.make_async_copy(x_hbm, o_hbm, sems.at[0])]
        else:
            copies = [
                pltpu.make_async_copy(
                    x_hbm.at[pl.ds(c * chunk_rows, chunk_rows)],
                    o_hbm.at[pl.ds(c * chunk_rows, chunk_rows)],
                    sems.at[c],
                )
                for c in range(n_chunks)
            ]
        for cp in copies:   # issue every DMA first ...
            cp.start()
        for cp in copies:   # ... then wait, so the engines run concurrently
            cp.wait()

    return kernel


@jax.jit
def _identity_copy(x):
    itemsize = jnp.dtype(x.dtype).itemsize
    nbytes = x.size * itemsize
    n_chunks = _pick_num_chunks(x.shape, itemsize)
    chunk_rows = (x.shape[0] // n_chunks) if x.ndim else 1

    return pl.pallas_call(
        _make_identity_dma_kernel(n_chunks, chunk_rows),
        out_shape=jax.ShapeDtypeStruct(x.shape, x.dtype),
        in_specs=[pl.BlockSpec(memory_space=pl.ANY)],
        out_specs=pl.BlockSpec(memory_space=pl.ANY),
        scratch_shapes=[pltpu.SemaphoreType.DMA((n_chunks,))],
        cost_estimate=pl.CostEstimate(
            flops=0, transcendentals=0, bytes_accessed=2 * nbytes),
    )(x)


def base_model_forward(x, *, materialize=True):
    """Identity forward (the only well-defined behavior of BaseModel).

    materialize=False: optimal identity -- returns `x` untouched (zero HBM
    traffic); recommended at real call sites.
    materialize=True : produces a fresh output buffer via an HBM->HBM DMA
    Pallas kernel (no VMEM round-trip, runs at HBM roofline).
    """
    if not materialize or x.ndim == 0 or x.size == 0:
        return x
    return _identity_copy(x)


if __name__ == "__main__":
    # BaseModel.__init__ takes `cfgs` but defines no parameters; nothing to init.
    cfgs = {"name": "base_model"}  # unused, mirrors the PyTorch constructor arg

    key = jax.random.PRNGKey(0)
    # Small NCHW input consistent with a typical vision model entry point.
    x = jax.random.normal(key, (2, 4, 16, 16), dtype=jnp.float32)

    # Zero-cost identity path (what real call sites should use).
    y_fast = base_model_forward(x, materialize=False)
    assert y_fast is x

    # Pallas HBM->HBM DMA identity kernel (materialized fresh output buffer).
    y = base_model_forward(x, materialize=True)
    y = jax.block_until_ready(y)

    assert y.shape == x.shape and y.dtype == x.dtype
    assert bool(jnp.allclose(y, x)), "identity pass-through mismatch"
    print("KERNEL_OK")
</pallas_src>

<mosaic_0001>
module attributes {stable_mosaic.version = 11 : i64} {
  func.func @kernel(%arg0: memref<2x4x16x16xf32, #tpu.memory_space<any>>, %arg1: memref<2x4x16x16xf32, #tpu.memory_space<any>>, %arg2: memref<1x!tpu.dma_semaphore, #tpu.memory_space<semaphore_mem>>) attributes {dimension_semantics = [], scalar_prefetch = 0 : i64, scratch_operands = 1 : i64, tpu.core_type = #tpu.core_type<tc>} {
    %c0_i32 = arith.constant 0 : i32
    %0 = tpu.memref_slice %arg2[%c0_i32] : memref<1x!tpu.dma_semaphore, #tpu.memory_space<semaphore_mem>> -> memref<1x!tpu.dma_semaphore, #tpu.memory_space<semaphore_mem>>
    %1 = tpu.memref_squeeze %0 : memref<1x!tpu.dma_semaphore, #tpu.memory_space<semaphore_mem>> -> memref<!tpu.dma_semaphore, #tpu.memory_space<semaphore_mem>>
    tpu.enqueue_dma source(%arg0 : memref<2x4x16x16xf32, #tpu.memory_space<any>>) target(%arg1 : memref<2x4x16x16xf32, #tpu.memory_space<any>>) target_semaphore(%1 : memref<!tpu.dma_semaphore, #tpu.memory_space<semaphore_mem>>)
    %c0_i32_0 = arith.constant 0 : i32
    %2 = tpu.memref_slice %arg2[%c0_i32_0] : memref<1x!tpu.dma_semaphore, #tpu.memory_space<semaphore_mem>> -> memref<1x!tpu.dma_semaphore, #tpu.memory_space<semaphore_mem>>
    %3 = tpu.memref_squeeze %2 : memref<1x!tpu.dma_semaphore, #tpu.memory_space<semaphore_mem>> -> memref<!tpu.dma_semaphore, #tpu.memory_space<semaphore_mem>>
    tpu.wait_dma2 semaphore(%3 : memref<!tpu.dma_semaphore, #tpu.memory_space<semaphore_mem>>) src(%arg0 : memref<2x4x16x16xf32, #tpu.memory_space<any>>) dst(%arg1 : memref<2x4x16x16xf32, #tpu.memory_space<any>>)
    return
  }
}

</mosaic_0001>

<llo_original>
// kernel: _identity_copy.1
$region0: #{_identity_copy.1}
  #allocation0 [shape = 'u32[]', space=smem, size = 0x4, offset = 0x4, fixed_abs, tag = 'smem constant byte address 0x4 - core index']
  #allocation1 [shape = 'u32[144,128]{1,0:T(1,128)}', space=vmem, size = 0x12000, scoped, tag = 'internal scratch']
  #allocation2 [shape = 's32[1]{0}', space=sflag, size = 0x4, scoped, tag = 'scratch operand']
  #allocation3 [shape = 's32[]', space=sflag, size = 0x4, offset = 0, fixed_abs, tag = 'sflag constant byte address 0x0 - dummy sync flag']
  #allocation4 [shape = 'u32[0]{0}', space=smem, size = 0, offset = 0, fixed_abs, tag = 'smem constant byte address 0x0 - null']
  %s0 = inlined_call_operand.hbm [shape: f32[2,4,16,16], index: 0, kind: input, shape index: {}]
  %s1 = inlined_call_operand.hbm [shape: f32[2,4,16,16], index: 1, kind: output, shape index: {}]
  %s2 = sld [smem:[#allocation0]]
  $region2: #{_identity_copy.1} parent=0
    _
  %s4 = ssub.s32 1, %s2
  %s5 = scalar_select 0, %s4, %s2
  %s7 = sshll.u32 1, 14
  %s8 = sxor.u32 4294967295, %s7
  %s11 = sshll.u32 3, 24
  %s12 = sxor.u32 4294967295, %s11
  %s13 = sand.u32 0, %s12
  %s15 = sor.u32 %s13, 0
  %18 = dma.general %s0, 2048, %s1, [#allocation2], [#allocation3], [#allocation4], %s15, 0
  %s19 = smul.u32 2, 4
  %s20 = smul.u32 %s19, 16
  %s21 = smul.u32 %s20, 1
  %s22 = sshll.u32 %s21, 4
  %23 = dma.done [#allocation2], %s22
  %24 = vsyncmov [#allocation2]
  %s25 = vpop.sfrf %24
  %p26 = scmp.eq.s32.totalorder %s25, 0
  %p27 = pneg %p26
  %29 = shalt.err (%p27)

</llo_original>
